<compile_context>
chip_gen: v7x
topology: tpu7x:2x2x1
jax: 0.10.0
libtpu: 0.0.40
codegen_flags: <defaults>
</compile_context>

<pallas_src>
from functools import partial

import numpy as np
import jax
import jax.numpy as jnp
from jax.experimental import pallas as pl
from jax.experimental.pallas import tpu as pltpu


def _truncation_kernel(w_ref, wavg_ref, o_ref, *, coefs, num_layers, d, fused_repeat):
    """w_ref: (tb, D) if fused_repeat else (tb, L*D); wavg_ref: (1, D); o_ref: (tb, L*D).

    coefs: tuple of per-layer Python floats (folded constants), or None when the
    module was built with use_truncation == False (pure repeat / copy).
    All slices below are static and lane-aligned (d is a multiple of 128 here).
    """
    if coefs is None:                           # no truncation: plain repeat / copy
        if fused_repeat:
            w = w_ref[...]
            for l in range(num_layers):
                o_ref[:, l * d:(l + 1) * d] = w
        else:
            o_ref[...] = w_ref[...]
        return

    wavg = wavg_ref[...]                        # (1, D), broadcast over the tb rows
    if fused_repeat:
        dw = w_ref[...] - wavg                  # (tb, D), computed once, reused per layer
        for l, c in enumerate(coefs):
            o_ref[:, l * d:(l + 1) * d] = wavg + dw * c
    else:
        for l, c in enumerate(coefs):
            wl = w_ref[:, l * d:(l + 1) * d]
            o_ref[:, l * d:(l + 1) * d] = wavg + (wl - wavg) * c


def truncation_forward(w, w_avg, *, num_layers, w_space_dim, repeat_w=True,
                       truncation_psi=0.7, truncation_layers=8, tile_b=None):
    """Forward pass of TruncationModule.

    w:     (B, w_space_dim) or (B, w_space_dim*num_layers) if 2D (repeat_w controls
           which), or (B, num_layers, w_space_dim) if 3D.
    w_avg: (w_space_dim,)
    Returns (B, num_layers, w_space_dim).
    """
    use_truncation = (truncation_psi is not None) and (truncation_layers is not None)

    L, D = num_layers, w_space_dim
    LD = L * D

    # Normalize the input layout (contiguous views only — no copies / transposes).
    if w.ndim == 2:
        if repeat_w:
            assert w.shape[1] == D
            w_flat = w                                  # (B, D): repeat fused in-kernel
            fused_repeat = True
        else:
            assert w.shape[1] == LD
            w_flat = w                                  # (B, L*D): already flat
            fused_repeat = False
    else:
        assert w.ndim == 3 and w.shape[1:] == (L, D)
        w_flat = w.reshape(-1, LD)                      # contiguous view
        fused_repeat = False
    B = w_flat.shape[0]

    coefs = None
    if use_truncation:
        coefs = tuple(float(truncation_psi) if i < truncation_layers else 1.0
                      for i in range(L))

    wavg2 = jnp.asarray(w_avg).reshape(1, D).astype(w.dtype)

    # Batch tile: big lane-dense blocks; the ragged final block is masked by Pallas,
    # so tb never degrades for awkward batch sizes.
    if tile_b is None:
        tile_b = 512 if fused_repeat else 256           # ~23 MB / ~21 MB dbl-buffered fp32
    if B > tile_b:
        tb = max(8, (tile_b // 8) * 8)                  # multiple of 8; last block partial
    elif B >= 16:
        tb = ((-(-B // 2) + 7) // 8) * 8                # 2 grid steps -> both TCs get work
    else:
        tb = B                                          # single block == full batch
    grid = (pl.cdiv(B, tb),)

    kernel = partial(_truncation_kernel, coefs=coefs, num_layers=L, d=D,
                     fused_repeat=fused_repeat)

    itemsize = int(w.dtype.itemsize)
    cost = pl.CostEstimate(
        flops=2 * B * LD, transcendentals=0,
        bytes_accessed=(int(w_flat.size) + B * LD + D) * itemsize)

    out_flat = pl.pallas_call(
        kernel,
        out_shape=jax.ShapeDtypeStruct((B, LD), w.dtype),
        grid_spec=pltpu.PrefetchScalarGridSpec(
            num_scalar_prefetch=0,
            grid=grid,
            in_specs=[
                pl.BlockSpec((tb, w_flat.shape[1]), lambda i: (i, 0)),
                pl.BlockSpec((1, D), lambda i: (0, 0)),
            ],
            out_specs=pl.BlockSpec((tb, LD), lambda i: (i, 0)),
        ),
        compiler_params=pltpu.CompilerParams(
            dimension_semantics=("parallel",),
            vmem_limit_bytes=40 * 1024 * 1024,
        ),
        cost_estimate=cost,
    )(w_flat, wavg2)

    return out_flat.reshape(B, L, D)


def _reference(w, w_avg, *, num_layers, w_space_dim, repeat_w=True,
               truncation_psi=0.7, truncation_layers=8):
    """Pure-JAX mirror of the PyTorch forward."""
    use_truncation = (truncation_psi is not None) and (truncation_layers is not None)
    if not use_truncation:
        truncation_psi, truncation_layers = 1.0, 0
    layer_idx = np.arange(num_layers).reshape(1, num_layers, 1)
    coefs = np.ones_like(layer_idx, dtype=np.float32)
    coefs[layer_idx < truncation_layers] *= truncation_psi
    coefs = jnp.asarray(coefs)
    if w.ndim == 2:
        if repeat_w:
            w = jnp.tile(w.reshape(-1, 1, w_space_dim), (1, num_layers, 1))
        else:
            w = w.reshape(-1, num_layers, w_space_dim)
    if use_truncation:
        wa = w_avg.reshape(1, 1, w_space_dim)
        w = wa + (w - wa) * coefs
    return w


if __name__ == "__main__":
    # Module defaults: w_space_dim=512, psi=0.7, truncation_layers=8;
    # num_layers=10 so both coefficient values (0.7 and 1.0) appear.
    num_layers, w_space_dim = 10, 512
    psi, tl = 0.7, 8

    key = jax.random.PRNGKey(0)
    k1, k2, k3, k4, k5 = jax.random.split(key, 5)

    # w_avg is zero-initialized in __init__ (updated during training); use a nonzero
    # deterministic value so the truncation lerp is actually exercised.
    w_avg = 0.1 * jax.random.normal(k5, (w_space_dim,), dtype=jnp.float32)

    def check(w, **kw):
        y = truncation_forward(w, w_avg, num_layers=num_layers,
                               w_space_dim=w_space_dim, **kw)
        y = jax.block_until_ready(y)
        kw_ref = {k: v for k, v in kw.items() if k != "tile_b"}
        y_ref = _reference(w, w_avg, num_layers=num_layers,
                           w_space_dim=w_space_dim, **kw_ref)
        np.testing.assert_allclose(np.asarray(y), np.asarray(y_ref),
                                   rtol=1e-5, atol=1e-5)
        assert y.shape[1:] == (num_layers, w_space_dim)
        return y

    # Case 1: 2D latent + repeat_w=True (common path), small batch -> single block.
    w2d = jax.random.normal(k1, (4, w_space_dim), dtype=jnp.float32)
    check(w2d, repeat_w=True, truncation_psi=psi, truncation_layers=tl)

    # Case 2: already-expanded (B, L, D) input, odd batch.
    w3d = jax.random.normal(k2, (3, num_layers, w_space_dim), dtype=jnp.float32)
    check(w3d, repeat_w=True, truncation_psi=psi, truncation_layers=tl)

    # Case 3: awkward batch (B=19) on the default tile -> 2 grid steps, ragged
    #         final block handled by Pallas boundary masking (no tb collapse).
    w2d_big = jax.random.normal(k3, (19, w_space_dim), dtype=jnp.float32)
    check(w2d_big, repeat_w=True, truncation_psi=psi, truncation_layers=tl)
    # Same batch with a forced small tile -> 3 grid steps incl. a 3-row partial block.
    check(w2d_big, repeat_w=True, truncation_psi=psi, truncation_layers=tl, tile_b=8)

    # Case 4: 2D latent with repeat_w=False (flat (B, L*D) input).
    w2d_flat = jax.random.normal(k4, (2, num_layers * w_space_dim), dtype=jnp.float32)
    check(w2d_flat, repeat_w=False, truncation_psi=psi, truncation_layers=tl)

    # Case 5: use_truncation=False -> module returns the (repeated) latent untouched.
    check(w2d, repeat_w=True, truncation_psi=None, truncation_layers=None)

    print("KERNEL_OK")
</pallas_src>

<mosaic_0001>
module attributes {stable_mosaic.version = 11 : i64} {
  func.func @_truncation_kernel(%arg0: i32, %arg1: memref<4x512xf32, #tpu.memory_space<vmem>>, %arg2: memref<1x512xf32, #tpu.memory_space<vmem>>, %arg3: memref<4x5120xf32, #tpu.memory_space<vmem>>) attributes {dimension_semantics = [#tpu.dimension_semantics<parallel>], iteration_bounds = array<i64: 1>, scalar_prefetch = 0 : i64, scratch_operands = 0 : i64, tpu.core_type = #tpu.core_type<tc>, window_params = [{transform_indices = @transform_0, window_bounds = array<i64: 4, 512>}, {pipeline_mode = #tpu.pipeline_mode<synchronous>, transform_indices = @transform_1, window_bounds = array<i64: 1, 512>}, {transform_indices = @transform_2, window_bounds = array<i64: 4, 5120>}]} {
    %c0 = arith.constant 0 : index
    %c0_0 = arith.constant 0 : index
    %0 = vector.load %arg2[%c0, %c0_0] : memref<1x512xf32, #tpu.memory_space<vmem>>, vector<1x512xf32>
    %c0_1 = arith.constant 0 : index
    %c0_2 = arith.constant 0 : index
    %1 = vector.load %arg1[%c0_1, %c0_2] : memref<4x512xf32, #tpu.memory_space<vmem>>, vector<4x512xf32>
    %2 = vector.broadcast %0 : vector<1x512xf32> to vector<4x512xf32>
    %3 = arith.subf %1, %2 : vector<4x512xf32>
    %cst = arith.constant 0.699999988 : f32
    %4 = vector.broadcast %cst : f32 to vector<4x512xf32>
    %5 = arith.mulf %3, %4 : vector<4x512xf32>
    %6 = vector.broadcast %0 : vector<1x512xf32> to vector<4x512xf32>
    %7 = arith.addf %6, %5 : vector<4x512xf32>
    %c0_3 = arith.constant 0 : index
    %c0_4 = arith.constant 0 : index
    %8 = vector.load %arg3[%c0_3, %c0_4] : memref<4x5120xf32, #tpu.memory_space<vmem>>, vector<4x512xf32>
    tpu.vector_store %arg3[%c0_3, %c0_4], %7 {strides = array<i32>} : memref<4x5120xf32, #tpu.memory_space<vmem>>, vector<4x512xf32>,
    %cst_5 = arith.constant 0.699999988 : f32
    %9 = vector.broadcast %cst_5 : f32 to vector<4x512xf32>
    %10 = arith.mulf %3, %9 : vector<4x512xf32>
    %11 = vector.broadcast %0 : vector<1x512xf32> to vector<4x512xf32>
    %12 = arith.addf %11, %10 : vector<4x512xf32>
    %c0_6 = arith.constant 0 : index
    %c512 = arith.constant 512 : index
    %13 = vector.load %arg3[%c0_6, %c512] : memref<4x5120xf32, #tpu.memory_space<vmem>>, vector<4x512xf32>
    tpu.vector_store %arg3[%c0_6, %c512], %12 {strides = array<i32>} : memref<4x5120xf32, #tpu.memory_space<vmem>>, vector<4x512xf32>,
    %cst_7 = arith.constant 0.699999988 : f32
    %14 = vector.broadcast %cst_7 : f32 to vector<4x512xf32>
    %15 = arith.mulf %3, %14 : vector<4x512xf32>
    %16 = vector.broadcast %0 : vector<1x512xf32> to vector<4x512xf32>
    %17 = arith.addf %16, %15 : vector<4x512xf32>
    %c0_8 = arith.constant 0 : index
    %c1024 = arith.constant 1024 : index
    %18 = vector.load %arg3[%c0_8, %c1024] : memref<4x5120xf32, #tpu.memory_space<vmem>>, vector<4x512xf32>
    tpu.vector_store %arg3[%c0_8, %c1024], %17 {strides = array<i32>} : memref<4x5120xf32, #tpu.memory_space<vmem>>, vector<4x512xf32>,
    %cst_9 = arith.constant 0.699999988 : f32
    %19 = vector.broadcast %cst_9 : f32 to vector<4x512xf32>
    %20 = arith.mulf %3, %19 : vector<4x512xf32>
    %21 = vector.broadcast %0 : vector<1x512xf32> to vector<4x512xf32>
    %22 = arith.addf %21, %20 : vector<4x512xf32>
    %c0_10 = arith.constant 0 : index
    %c1536 = arith.constant 1536 : index
    %23 = vector.load %arg3[%c0_10, %c1536] : memref<4x5120xf32, #tpu.memory_space<vmem>>, vector<4x512xf32>
    tpu.vector_store %arg3[%c0_10, %c1536], %22 {strides = array<i32>} : memref<4x5120xf32, #tpu.memory_space<vmem>>, vector<4x512xf32>,
    %cst_11 = arith.constant 0.699999988 : f32
    %24 = vector.broadcast %cst_11 : f32 to vector<4x512xf32>
    %25 = arith.mulf %3, %24 : vector<4x512xf32>
    %26 = vector.broadcast %0 : vector<1x512xf32> to vector<4x512xf32>
    %27 = arith.addf %26, %25 : vector<4x512xf32>
    %c0_12 = arith.constant 0 : index
    %c2048 = arith.constant 2048 : index
    %28 = vector.load %arg3[%c0_12, %c2048] : memref<4x5120xf32, #tpu.memory_space<vmem>>, vector<4x512xf32>
    tpu.vector_store %arg3[%c0_12, %c2048], %27 {strides = array<i32>} : memref<4x5120xf32, #tpu.memory_space<vmem>>, vector<4x512xf32>,
    %cst_13 = arith.constant 0.699999988 : f32
    %29 = vector.broadcast %cst_13 : f32 to vector<4x512xf32>
    %30 = arith.mulf %3, %29 : vector<4x512xf32>
    %31 = vector.broadcast %0 : vector<1x512xf32> to vector<4x512xf32>
    %32 = arith.addf %31, %30 : vector<4x512xf32>
    %c0_14 = arith.constant 0 : index
    %c2560 = arith.constant 2560 : index
    %33 = vector.load %arg3[%c0_14, %c2560] : memref<4x5120xf32, #tpu.memory_space<vmem>>, vector<4x512xf32>
    tpu.vector_store %arg3[%c0_14, %c2560], %32 {strides = array<i32>} : memref<4x5120xf32, #tpu.memory_space<vmem>>, vector<4x512xf32>,
    %cst_15 = arith.constant 0.699999988 : f32
    %34 = vector.broadcast %cst_15 : f32 to vector<4x512xf32>
    %35 = arith.mulf %3, %34 : vector<4x512xf32>
    %36 = vector.broadcast %0 : vector<1x512xf32> to vector<4x512xf32>
    %37 = arith.addf %36, %35 : vector<4x512xf32>
    %c0_16 = arith.constant 0 : index
    %c3072 = arith.constant 3072 : index
    %38 = vector.load %arg3[%c0_16, %c3072] : memref<4x5120xf32, #tpu.memory_space<vmem>>, vector<4x512xf32>
    tpu.vector_store %arg3[%c0_16, %c3072], %37 {strides = array<i32>} : memref<4x5120xf32, #tpu.memory_space<vmem>>, vector<4x512xf32>,
    %cst_17 = arith.constant 0.699999988 : f32
    %39 = vector.broadcast %cst_17 : f32 to vector<4x512xf32>
    %40 = arith.mulf %3, %39 : vector<4x512xf32>
    %41 = vector.broadcast %0 : vector<1x512xf32> to vector<4x512xf32>
    %42 = arith.addf %41, %40 : vector<4x512xf32>
    %c0_18 = arith.constant 0 : index
    %c3584 = arith.constant 3584 : index
    %43 = vector.load %arg3[%c0_18, %c3584] : memref<4x5120xf32, #tpu.memory_space<vmem>>, vector<4x512xf32>
    tpu.vector_store %arg3[%c0_18, %c3584], %42 {strides = array<i32>} : memref<4x5120xf32, #tpu.memory_space<vmem>>, vector<4x512xf32>,
    %cst_19 = arith.constant 1.000000e+00 : f32
    %44 = vector.broadcast %cst_19 : f32 to vector<4x512xf32>
    %45 = arith.mulf %3, %44 : vector<4x512xf32>
    %46 = vector.broadcast %0 : vector<1x512xf32> to vector<4x512xf32>
    %47 = arith.addf %46, %45 : vector<4x512xf32>
    %c0_20 = arith.constant 0 : index
    %c4096 = arith.constant 4096 : index
    %48 = vector.load %arg3[%c0_20, %c4096] : memref<4x5120xf32, #tpu.memory_space<vmem>>, vector<4x512xf32>
    tpu.vector_store %arg3[%c0_20, %c4096], %47 {strides = array<i32>} : memref<4x5120xf32, #tpu.memory_space<vmem>>, vector<4x512xf32>,
    %cst_21 = arith.constant 1.000000e+00 : f32
    %49 = vector.broadcast %cst_21 : f32 to vector<4x512xf32>
    %50 = arith.mulf %3, %49 : vector<4x512xf32>
    %51 = vector.broadcast %0 : vector<1x512xf32> to vector<4x512xf32>
    %52 = arith.addf %51, %50 : vector<4x512xf32>
    %c0_22 = arith.constant 0 : index
    %c4608 = arith.constant 4608 : index
    %53 = vector.load %arg3[%c0_22, %c4608] : memref<4x5120xf32, #tpu.memory_space<vmem>>, vector<4x512xf32>
    tpu.vector_store %arg3[%c0_22, %c4608], %52 {strides = array<i32>} : memref<4x5120xf32, #tpu.memory_space<vmem>>, vector<4x512xf32>,
    return
  }
  func.func @transform_0(%arg0: i32) -> (i32, i32) {
    %c0_i32 = arith.constant 0 : i32
    %c0_i32_0 = arith.constant 0 : i32
    return %arg0, %c0_i32 : i32, i32
  }
  func.func @transform_1(%arg0: i32) -> (i32, i32) {
    %c0_i32 = arith.constant 0 : i32
    %c0_i32_0 = arith.constant 0 : i32
    %c0_i32_1 = arith.constant 0 : i32
    return %c0_i32, %c0_i32_0 : i32, i32
  }
  func.func @transform_2(%arg0: i32) -> (i32, i32) {
    %c0_i32 = arith.constant 0 : i32
    %c0_i32_0 = arith.constant 0 : i32
    return %arg0, %c0_i32 : i32, i32
  }
}

</mosaic_0001>

<llo_original>
// kernel: tpu_custom_call.1
$region0: #{tpu_custom_call.1}
  #allocation0 [shape = 'u32[]', space=smem, size = 0x4, offset = 0x4, fixed_abs, tag = 'smem constant byte address 0x4 - core index']
  #allocation1 [shape = 'u32[144,128]{1,0:T(1,128)}', space=vmem, size = 0x12000, scoped, tag = 'internal scratch']
  %s0 = inlined_call_operand.hbm [shape: f32[4,512], index: 0, kind: input, shape index: {}]
  %s1 = inlined_call_operand.hbm [shape: f32[1,512], index: 1, kind: input, shape index: {}]
  %s2 = inlined_call_operand.hbm [shape: f32[4,5120], index: 2, kind: output, shape index: {}]
  %s3 = sld [smem:[#allocation0]]
  $region26: #{tpu_custom_call.1} parent=0
    _
  %s5 = ssub.s32 1, %s3
  %s6 = scalar_select 0, %s5, %s3
  $region1: #{tpu_custom_call.1} parent=0
    #allocation2 [shape = 'u8[8192]{0}', space=vmem, size = 0x2000, scoped, tag = 'input window, operand 0, single buffered']
    #allocation3 [shape = 's32[1]{0}', space=sflag, size = 0x4, scoped, tag = 'scoped memory for tpu_custom_call.1']
    #allocation4 [shape = 's32[1]{0}', space=sflag, size = 0x4, scoped, tag = 'scoped memory for tpu_custom_call.1']
    #allocation5 [shape = 'u8[2048]{0}', space=vmem, size = 0x800, scoped, tag = 'input window, operand 1, single buffered']
    #allocation6 [shape = 's32[1]{0}', space=sflag, size = 0x4, scoped, tag = 'scoped memory for tpu_custom_call.1']
    #allocation7 [shape = 'u8[81920]{0}', space=vmem, size = 0x14000, scoped, tag = 'output window, operand 0, single buffered']
    %7 = vsyncpa [#allocation3], 0
    %8 = vsyncpa [#allocation6], 0
    %9 = vsyncpa [#allocation4], 0
    // Predicated region
    $region2: #{tpu_custom_call.1} parent=1 // pred_check
      _
    $region3: #{tpu_custom_call.1} parent=1 // pred_check_branch
      %11 = sbr.rel (0) target = $region5
    $region4: #{tpu_custom_call.1} parent=1 // pred_region
      %s13 = ssub.s32 256, 256
      %14 = vsyncadd [#allocation3], %s13
      %s16 = sshll.u32 [#allocation2], 4
      %s17 = int_to_ptr.vmem [resolvable:$true] %s16
      %19 = dma.hbm_to_vmem [thread:$0]  %s0, 256, %s17, [#allocation3]
    $region5: #{tpu_custom_call.1} parent=1 // pred_fallthru
      _
    // Predicated region
    $region6: #{tpu_custom_call.1} parent=1 // pred_check
      _
    $region7: #{tpu_custom_call.1} parent=1 // pred_check_branch
      %21 = sbr.rel (0) target = $region9
    $region8: #{tpu_custom_call.1} parent=1 // pred_region
      %s23 = ssub.s32 64, 64
      %24 = vsyncadd [#allocation6], %s23
      %s26 = sshll.u32 [#allocation5], 4
      %s27 = int_to_ptr.vmem [resolvable:$true] %s26
      %29 = dma.hbm_to_vmem [thread:$0]  %s1, 64, %s27, [#allocation6]
    $region9: #{tpu_custom_call.1} parent=1 // pred_fallthru
      _
    // Predicated region
    $region10: #{tpu_custom_call.1} parent=1 // pred_check
      _
    $region11: #{tpu_custom_call.1} parent=1 // pred_check_branch
      %31 = sbr.rel (0) target = $region13
    $region12: #{tpu_custom_call.1} parent=1 // pred_region
      %32 = dma.done [#allocation3], 256
    $region13: #{tpu_custom_call.1} parent=1 // pred_fallthru
      _
    // Predicated region
    $region14: #{tpu_custom_call.1} parent=1 // pred_check
      _
    $region15: #{tpu_custom_call.1} parent=1 // pred_check_branch
      %34 = sbr.rel (0) target = $region17
    $region16: #{tpu_custom_call.1} parent=1 // pred_region
      %35 = dma.done [#allocation6], 64
    $region17: #{tpu_custom_call.1} parent=1 // pred_fallthru
      _
    %v36 = vld [vmem:[#allocation5] sm:$0xf]
    %v37 = vld [vmem:[#allocation2] sm:$0xff]
    %v38 = vld [vmem:[#allocation2 + $0x8] sm:$0xff]
    %v40 = vlaneseq
    %v41 = vshrl.u32 %v40, 7
    %v42 = vsub.s32 0, %v41
    %v43 = vrot.slane %v36, %v42
    %v44 = vlaneseq
    %v45 = vshrl.u32 %v44, 7
    %v46 = vsub.s32 1, %v45
    %v47 = vrot.slane %v36, %v46
    %v48 = vlaneseq
    %v49 = vshrl.u32 %v48, 7
    %v50 = vsub.s32 2, %v49
    %v51 = vrot.slane %v36, %v50
    %v52 = vlaneseq
    %v53 = vshrl.u32 %v52, 7
    %v54 = vsub.s32 3, %v53
    %v55 = vrot.slane %v36, %v54
    %v60 = vcombine.low %v43, %v47
    %v61 = vcombine.low %v51, %v55
    %v64 = vsub.f32 %v37, %v60
    %v65 = vsub.f32 %v38, %v61
    %v66 = vmul.f32 %v64, 0.7
    %v67 = vmul.f32 %v65, 0.7
    %v70 = vcombine.high %v66, %v66
    %v71 = vcombine.high %v67, %v67
    %v74 = vadd.f32 %v43, %v66
    %v75 = vadd.f32 %v47, %v70
    %v76 = vadd.f32 %v51, %v67
    %v77 = vadd.f32 %v55, %v71
    %v82 = vcombine.low %v74, %v75
    %v83 = vcombine.low %v76, %v77
    %86 = vst [vmem:[#allocation7] sm:$0xff] %v82
    %87 = vst [vmem:[#allocation7 + $0x8] sm:$0xff] %v83
    %88 = vst [vmem:[#allocation7 + $0x10] sm:$0xff] %v82
    %89 = vst [vmem:[#allocation7 + $0x18] sm:$0xff] %v83
    %90 = vst [vmem:[#allocation7 + $0x20] sm:$0xff] %v82
    %91 = vst [vmem:[#allocation7 + $0x28] sm:$0xff] %v83
    %92 = vst [vmem:[#allocation7 + $0x30] sm:$0xff] %v82
    %93 = vst [vmem:[#allocation7 + $0x38] sm:$0xff] %v83
    %94 = vst [vmem:[#allocation7 + $0x40] sm:$0xff] %v82
    %95 = vst [vmem:[#allocation7 + $0x48] sm:$0xff] %v83
    %96 = vst [vmem:[#allocation7 + $0x50] sm:$0xff] %v82
    %97 = vst [vmem:[#allocation7 + $0x58] sm:$0xff] %v83
    %98 = vst [vmem:[#allocation7 + $0x60] sm:$0xff] %v82
    %99 = vst [vmem:[#allocation7 + $0x68] sm:$0xff] %v83
    %100 = vst [vmem:[#allocation7 + $0x70] sm:$0xff] %v82
    %101 = vst [vmem:[#allocation7 + $0x78] sm:$0xff] %v83
    %v104 = vcombine.high %v64, %v64
    %v105 = vcombine.high %v65, %v65
    %v108 = vadd.f32 %v43, %v64
    %v109 = vadd.f32 %v47, %v104
    %v110 = vadd.f32 %v51, %v65
    %v111 = vadd.f32 %v55, %v105
    %v116 = vcombine.low %v108, %v109
    %v117 = vcombine.low %v110, %v111
    %120 = vst [vmem:[#allocation7 + $0x80] sm:$0xff] %v116
    %121 = vst [vmem:[#allocation7 + $0x88] sm:$0xff] %v117
    %122 = vst [vmem:[#allocation7 + $0x90] sm:$0xff] %v116
    %123 = vst [vmem:[#allocation7 + $0x98] sm:$0xff] %v117
    // Predicated region
    $region18: #{tpu_custom_call.1} parent=1 // pred_check
      _
    $region19: #{tpu_custom_call.1} parent=1 // pred_check_branch
      %125 = sbr.rel (0) target = $region21
    $region20: #{tpu_custom_call.1} parent=1 // pred_region
      %s127 = ssub.s32 2560, 2560
      %128 = vsyncadd [#allocation4], %s127
      %s130 = sshll.u32 [#allocation7], 4
      %s131 = int_to_ptr.vmem [resolvable:$true] %s130
      %133 = dma.vmem_to_hbm [thread:$0]  %s131, 2560, %s2, [#allocation4]
    $region21: #{tpu_custom_call.1} parent=1 // pred_fallthru
      _
    // Predicated region
    $region22: #{tpu_custom_call.1} parent=1 // pred_check
      _
    $region23: #{tpu_custom_call.1} parent=1 // pred_check_branch
      %135 = sbr.rel (0) target = $region25
    $region24: #{tpu_custom_call.1} parent=1 // pred_region
      %136 = dma.done [#allocation4], 2560
    $region25: #{tpu_custom_call.1} parent=1 // pred_fallthru
      _
    %137 = vsyncpa [#allocation3], 1
    %138 = vsyncpa [#allocation6], 1
    %139 = vsyncpa [#allocation4], 1

</llo_original>
